<compile_context>
chip_gen: v7x
topology: tpu7x:2x2x1
jax: 0.10.0
libtpu: 0.0.40
codegen_flags: <defaults>
</compile_context>

<pallas_src>
import jax
import jax.numpy as jnp
from jax.experimental import pallas as pl
from jax.experimental.pallas import tpu as pltpu


def _round_up(x: int, m: int) -> int:
    return ((x + m - 1) // m) * m


def _fast_pow(x, p):
    """x**p without jnp.power (EUP log+exp) for the common small integer powers.

    Returns None when p == 0 (i.e. the result is the constant 1.0)."""
    if p == 0.0:
        return None
    if p == 1.0:
        return x
    if p == 2.0:
        return x * x
    if p == 3.0:
        return x * x * x
    if p == 4.0:
        x2 = x * x
        return x2 * x2
    return jnp.power(x, p)


def _make_kernel(*, gamma_pos, gamma_neg, k, clip, has_mask, has_weight,
                 binary_target, n_rows, tile_rows, needs_row_mask):
    """Build a kernel computing one lane-dense per-tile partial sum of the loss."""
    eps = 1e-8
    asymmetric_focus = (gamma_pos > 0) or (gamma_neg > 0)

    def kernel(*refs):
        it = iter(refs)
        pred_ref = next(it)
        target_ref = next(it)
        mask_ref = next(it) if has_mask else None
        weight_ref = next(it) if has_weight else None
        out_ref = next(it)

        pred = pred_ref[...].astype(jnp.float32)
        target = target_ref[...].astype(jnp.float32)

        if binary_target:
            # target in {0,1}: one sigmoid + one log per element.
            is_pos = target > 0.5
            s = jax.nn.sigmoid(jnp.where(is_pos, pred, -pred))
            if clip > 0:
                val_neg = jnp.minimum(s + clip, 1.0)     # xs_neg for negatives
            else:
                val_neg = s
            val = jnp.where(is_pos, s, val_neg)           # xs_pos | xs_neg
            coef = jnp.where(is_pos, -k, -(1.0 - k))
            loss = coef * jnp.log(jnp.maximum(val, eps))
            if asymmetric_focus:
                one_minus_s = 1.0 - s
                if clip > 0:
                    pt_pos = jnp.minimum(one_minus_s + clip, 1.0)  # xs_neg for positives
                else:
                    pt_pos = one_minus_s
                pt_neg = one_minus_s                               # xs_pos for negatives
                w_pos = _fast_pow(pt_pos, gamma_pos)
                w_neg = _fast_pow(pt_neg, gamma_neg)
                w_pos = 1.0 if w_pos is None else w_pos
                w_neg = 1.0 if w_neg is None else w_neg
                loss = loss * jnp.where(is_pos, w_pos, w_neg)
        else:
            # General (soft-target) path, exact module math.
            anti = 1.0 - target
            xs_pos = jax.nn.sigmoid(pred)
            if clip > 0:
                if clip >= 1e-3:
                    # Save the second sigmoid; clip dominates any cancellation.
                    xs_neg = jnp.minimum((1.0 - xs_pos) + clip, 1.0)
                else:
                    xs_neg = jnp.minimum(jax.nn.sigmoid(-pred) + clip, 1.0)
            else:
                xs_neg = jax.nn.sigmoid(-pred)
            loss = ((-k) * target * jnp.log(jnp.maximum(xs_pos, eps))
                    - (1.0 - k) * anti * jnp.log(jnp.maximum(xs_neg, eps)))
            if asymmetric_focus:
                pos_target = xs_neg * target + xs_pos * anti
                one_sided_gamma = gamma_pos * target + gamma_neg * anti
                loss = loss * jnp.power(pos_target, one_sided_gamma)

        if has_mask:
            loss = loss * mask_ref[...].astype(jnp.float32)

        # Class-axis reduce first; the sample weight broadcasts over classes so it
        # is folded in per-row (tile_rows muls instead of tile_rows*C).
        row = jnp.sum(loss, axis=1, keepdims=True)        # (tile_rows, 1)
        if has_weight:
            row = row * weight_ref[...].astype(jnp.float32)
        if needs_row_mask:
            # Rows past n in the last (partial) tile hold undefined data; jnp.where
            # is a select, so NaN/Inf garbage in the dropped branch cannot leak.
            rows_left = n_rows - pl.program_id(0) * tile_rows
            row_ids = jax.lax.broadcasted_iota(jnp.int32, (tile_rows, 1), 0)
            row = jnp.where(row_ids < rows_left, row, 0.0)

        # Lane-dense, (8,128)-conformant partial-sum write: one unmasked vst.
        out_ref[...] = jnp.broadcast_to(jnp.sum(row), (8, 128))

    return kernel


def asymmetric_angular_loss_with_ignore_pallas(
    pred, target, valid_label_mask=None, weight=None, *,
    gamma_pos=0.0, gamma_neg=1.0, k=0.8, clip=0.05,
    reduction="sum", avg_factor=None, loss_weight=1.0,
    target_block_bytes=None, min_tiles=4, assume_binary_target=None,
):
    """Asymmetric angular loss with ignore, reduced inside a Pallas TPU kernel."""
    if pred.shape != target.shape:
        raise ValueError("pred and target should be in the same shape.")
    if pred.ndim != 2:
        raise ValueError("expected 2-D (N, C) pred/target")
    if reduction not in ("sum", "mean"):
        # TODO(synk): reduction='none' would need a second, elementwise-output kernel.
        raise NotImplementedError(f"reduction={reduction!r} not implemented in the Pallas path")
    if weight is not None and weight.ndim != 1:
        raise ValueError("weight must be 1-D (sample-wise)")

    n, c = pred.shape
    has_mask = valid_label_mask is not None
    has_weight = weight is not None

    if assume_binary_target is None:
        # Integer / bool targets are necessarily binary-compatible; float targets
        # use the exact general path unless the caller opts in.
        assume_binary_target = bool(
            jnp.issubdtype(target.dtype, jnp.integer)
            or jnp.issubdtype(target.dtype, jnp.bool_)
        )

    # ---- tiling / VMEM budget ------------------------------------------------
    c_lanes = _round_up(c, 128)
    try:
        vmem_cap = int(getattr(pltpu.get_tpu_info(), "vmem_capacity_bytes", 64 << 20))
    except Exception:  # pragma: no cover - conservative fallback
        vmem_cap = 64 << 20
    if target_block_bytes is None:
        # Bigger blocks on 128 MiB VMEM parts (v5e/v6e), smaller on 64 MiB (v7x).
        target_block_bytes = (4 << 20) if vmem_cap >= (96 << 20) else (2 << 20)

    max_rows_by_vmem = max(8, (target_block_bytes // (4 * c_lanes)) // 8 * 8)
    # Keep at least `min_tiles` grid steps when possible so the "parallel" grid
    # axis actually shards across both v7x TensorCores.
    max_rows_by_tiles = max(8, _round_up(pl.cdiv(n, max(min_tiles, 1)), 8))
    tile_rows = min(max_rows_by_vmem, max_rows_by_tiles, _round_up(n, 8))
    num_tiles = pl.cdiv(n, tile_rows)
    needs_row_mask = (n % tile_rows) != 0

    # ---- inputs / specs (no wrapper-side padding: last block dim == full C) --
    spec2d = pl.BlockSpec((tile_rows, c), lambda i: (i, 0))
    inputs = [pred, target]
    in_specs = [spec2d, spec2d]
    if has_mask:
        inputs.append(valid_label_mask)
        in_specs.append(spec2d)
    if has_weight:
        inputs.append(weight.reshape(n, 1))
        in_specs.append(pl.BlockSpec((tile_rows, 1), lambda i: (i, 0)))

    # VMEM budget: double-buffered input blocks + f32 temporaries + headroom.
    in_bytes_per_step = sum(
        tile_rows * c_lanes * a.dtype.itemsize for a in inputs[:2 + int(has_mask)]
    )
    if has_weight:
        in_bytes_per_step += tile_rows * 128 * 4
    f32_block = tile_rows * c_lanes * 4
    vmem_limit = 2 * in_bytes_per_step + 8 * f32_block + (2 << 20)
    vmem_limit = int(max(24 << 20, min(vmem_limit, int(vmem_cap * 0.85))))

    total_elems = n * c
    bytes_in = sum(int(a.size) * a.dtype.itemsize for a in inputs)
    cost = pl.CostEstimate(
        flops=int(14 * total_elems),
        transcendentals=int((2 if assume_binary_target else 4) * total_elems),
        bytes_accessed=int(bytes_in + num_tiles * 8 * 128 * 4),
    )

    kernel = _make_kernel(
        gamma_pos=gamma_pos, gamma_neg=gamma_neg, k=k, clip=clip,
        has_mask=has_mask, has_weight=has_weight,
        binary_target=assume_binary_target,
        n_rows=n, tile_rows=tile_rows, needs_row_mask=needs_row_mask,
    )

    partials = pl.pallas_call(
        kernel,
        out_shape=jax.ShapeDtypeStruct((8 * num_tiles, 128), jnp.float32),
        grid_spec=pltpu.PrefetchScalarGridSpec(
            num_scalar_prefetch=0,
            grid=(num_tiles,),
            in_specs=in_specs,
            out_specs=pl.BlockSpec((8, 128), lambda i: (i, 0)),
        ),
        compiler_params=pltpu.CompilerParams(
            dimension_semantics=("parallel",),
            vmem_limit_bytes=vmem_limit,
        ),
        cost_estimate=cost,
    )(*inputs)

    # Each tile broadcast its scalar partial into a full (8,128) block; pick one
    # representative lane per tile and finish the (tiny) reduce here.
    total = jnp.sum(partials[::8, 0])

    if reduction == "sum":
        out = total
    else:  # mean (avg_factor only applies to mean, mirroring the torch module)
        denom = avg_factor if avg_factor is not None else float(total_elems)
        out = total / denom
    return loss_weight * out


# ----------------------------------------------------------------------------
# Pure-JAX reference mirroring the PyTorch module (for correctness checks).
# ----------------------------------------------------------------------------
def _reference_jax(pred, target, valid_label_mask=None, weight=None, *,
                   gamma_pos=0.0, gamma_neg=1.0, k=0.8, clip=0.05,
                   reduction="sum", avg_factor=None, loss_weight=1.0):
    eps = 1e-8
    pred = pred.astype(jnp.float32)
    target = target.astype(jnp.float32)
    anti = 1.0 - target
    xs_pos = jax.nn.sigmoid(pred)
    xs_neg = jax.nn.sigmoid(-pred)
    if clip > 0:
        xs_neg = jnp.minimum(xs_neg + clip, 1.0)
    loss = (-k * target * jnp.log(jnp.maximum(xs_pos, eps))
            - (1.0 - k) * anti * jnp.log(jnp.maximum(xs_neg, eps)))
    if gamma_pos > 0 or gamma_neg > 0:
        pos_target = xs_neg * target + xs_pos * anti
        gamma = gamma_pos * target + gamma_neg * anti
        loss = loss * jnp.power(pos_target, gamma)
    if valid_label_mask is not None:
        loss = loss * valid_label_mask.astype(jnp.float32)
    if weight is not None:
        loss = loss * weight.astype(jnp.float32).reshape(-1, 1)
    if reduction == "sum":
        red = jnp.sum(loss)
    elif reduction == "mean":
        red = jnp.sum(loss) / avg_factor if avg_factor is not None else jnp.mean(loss)
    else:
        red = loss
    return loss_weight * red


if __name__ == "__main__":
    key = jax.random.PRNGKey(0)
    ks = jax.random.split(key, 8)

    def check(got, ref, name, rtol=2e-4, atol=1e-4):
        got = jax.block_until_ready(got)
        ref = jax.block_until_ready(ref)
        assert jnp.allclose(got, ref, rtol=rtol, atol=atol), (name, got, ref)

    # --- Test 1: module defaults (sum), mask + weight, C < 128 (no padding path) ---
    N, C = 16, 32
    pred = jax.random.normal(ks[0], (N, C), jnp.float32) * 3.0
    target = (jax.random.uniform(ks[1], (N, C)) > 0.7).astype(jnp.float32)
    mask = (jax.random.uniform(ks[2], (N, C)) > 0.1).astype(jnp.float32)
    weight = jnp.linspace(0.5, 1.5, N, dtype=jnp.float32)
    out1 = asymmetric_angular_loss_with_ignore_pallas(
        pred, target, mask, weight, reduction="sum", assume_binary_target=True)
    ref1 = _reference_jax(pred, target, mask, weight, reduction="sum")
    check(out1, ref1, "t1")

    # --- Test 2: many tiles + partial last tile (N=52, 8-row tiles), C=200 (non-128) ---
    N2, C2 = 52, 200
    pred2 = jax.random.normal(ks[3], (N2, C2), jnp.float32) * 2.0
    target2 = (jax.random.uniform(ks[4], (N2, C2)) > 0.6).astype(jnp.float32)
    mask2 = (jax.random.uniform(ks[5], (N2, C2)) > 0.2).astype(jnp.float32)
    weight2 = jnp.linspace(0.25, 2.0, N2, dtype=jnp.float32)
    out2 = asymmetric_angular_loss_with_ignore_pallas(
        pred2, target2, mask2, weight2, reduction="sum",
        assume_binary_target=True, target_block_bytes=8192)
    ref2 = _reference_jax(pred2, target2, mask2, weight2, reduction="sum")
    check(out2, ref2, "t2")

    # --- Test 3: general (soft-target) path, focusing on, mean reduction ---
    N3, C3 = 10, 130
    pred3 = jax.random.normal(ks[6], (N3, C3), jnp.float32)
    target3 = jax.random.uniform(ks[7], (N3, C3), jnp.float32)
    out3 = asymmetric_angular_loss_with_ignore_pallas(
        pred3, target3, None, None, gamma_pos=1.0, gamma_neg=4.0,
        reduction="mean", assume_binary_target=False)
    ref3 = _reference_jax(pred3, target3, None, None, gamma_pos=1.0, gamma_neg=4.0,
                          reduction="mean")
    check(out3, ref3, "t3")

    # --- Test 4: int targets (binary auto-detected), mean + avg_factor + loss_weight ---
    N4, C4 = 24, 96
    pred4 = jax.random.normal(ks[0], (N4, C4), jnp.float32)
    target4 = (jax.random.uniform(ks[1], (N4, C4)) > 0.5).astype(jnp.int32)
    mask4 = (jax.random.uniform(ks[2], (N4, C4)) > 0.15).astype(jnp.float32)
    out4 = asymmetric_angular_loss_with_ignore_pallas(
        pred4, target4, mask4, None, reduction="mean", avg_factor=37.0,
        loss_weight=2.5)
    ref4 = _reference_jax(pred4, target4, mask4, None, reduction="mean",
                          avg_factor=37.0, loss_weight=2.5)
    check(out4, ref4, "t4")

    print("KERNEL_OK")
</pallas_src>

<mosaic_0001>
module attributes {stable_mosaic.version = 11 : i64} {
  func.func @kernel(%arg0: i32, %arg1: memref<8x32xf32, #tpu.memory_space<vmem>>, %arg2: memref<8x32xf32, #tpu.memory_space<vmem>>, %arg3: memref<8x32xf32, #tpu.memory_space<vmem>>, %arg4: memref<8x1xf32, #tpu.memory_space<vmem>>, %arg5: memref<8x128xf32, #tpu.memory_space<vmem>>) attributes {dimension_semantics = [#tpu.dimension_semantics<parallel>], iteration_bounds = array<i64: 2>, scalar_prefetch = 0 : i64, scratch_operands = 0 : i64, tpu.core_type = #tpu.core_type<tc>, window_params = [{transform_indices = @transform_0, window_bounds = array<i64: 8, 32>}, {transform_indices = @transform_1, window_bounds = array<i64: 8, 32>}, {transform_indices = @transform_2, window_bounds = array<i64: 8, 32>}, {transform_indices = @transform_3, window_bounds = array<i64: 8, 1>}, {transform_indices = @transform_4, window_bounds = array<i64: 8, 128>}]} {
    %c0 = arith.constant 0 : index
    %c0_0 = arith.constant 0 : index
    %0 = vector.load %arg1[%c0, %c0_0] : memref<8x32xf32, #tpu.memory_space<vmem>>, vector<8x32xf32>
    %c0_1 = arith.constant 0 : index
    %c0_2 = arith.constant 0 : index
    %1 = vector.load %arg2[%c0_1, %c0_2] : memref<8x32xf32, #tpu.memory_space<vmem>>, vector<8x32xf32>
    %cst = arith.constant 5.000000e-01 : f32
    %2 = vector.broadcast %cst : f32 to vector<8x32xf32>
    %3 = arith.cmpf ogt, %1, %2 : vector<8x32xf32>
    %cst_3 = arith.constant 0.000000e+00 : f32
    %4 = vector.broadcast %cst_3 : f32 to vector<8x32xf32>
    %5 = arith.subf %4, %0 : vector<8x32xf32>
    %6 = arith.select %3, %0, %5 : vector<8x32xi1>, vector<8x32xf32>
    %7 = arith.negf %6 : vector<8x32xf32>
    %8 = math.exp %7 : vector<8x32xf32>
    %cst_4 = arith.constant 1.000000e+00 : f32
    %9 = vector.broadcast %cst_4 : f32 to vector<8x32xf32>
    %10 = arith.addf %9, %8 : vector<8x32xf32>
    %11 = arith.divf %9, %10 : vector<8x32xf32>
    %cst_5 = arith.constant 5.000000e-02 : f32
    %12 = vector.broadcast %cst_5 : f32 to vector<8x32xf32>
    %13 = arith.addf %11, %12 : vector<8x32xf32>
    %cst_6 = arith.constant 1.000000e+00 : f32
    %14 = vector.broadcast %cst_6 : f32 to vector<8x32xf32>
    %15 = arith.minimumf %13, %14 : vector<8x32xf32>
    %16 = arith.select %3, %11, %15 : vector<8x32xi1>, vector<8x32xf32>
    %cst_7 = arith.constant -8.000000e-01 : f32
    %cst_8 = arith.constant -2.000000e-01 : f32
    %17 = vector.broadcast %cst_7 : f32 to vector<8x32xf32>
    %18 = vector.broadcast %cst_8 : f32 to vector<8x32xf32>
    %19 = arith.select %3, %17, %18 : vector<8x32xi1>, vector<8x32xf32>
    %cst_9 = arith.constant 9.99999993E-9 : f32
    %20 = vector.broadcast %cst_9 : f32 to vector<8x32xf32>
    %21 = arith.maximumf %16, %20 : vector<8x32xf32>
    %22 = math.log %21 : vector<8x32xf32>
    %23 = arith.mulf %19, %22 : vector<8x32xf32>
    %cst_10 = arith.constant 1.000000e+00 : f32
    %24 = vector.broadcast %cst_10 : f32 to vector<8x32xf32>
    %25 = arith.subf %24, %11 : vector<8x32xf32>
    %cst_11 = arith.constant 1.000000e+00 : f32
    %26 = vector.broadcast %cst_11 : f32 to vector<8x32xf32>
    %27 = arith.select %3, %26, %25 : vector<8x32xi1>, vector<8x32xf32>
    %28 = arith.mulf %23, %27 : vector<8x32xf32>
    %c0_12 = arith.constant 0 : index
    %c0_13 = arith.constant 0 : index
    %29 = vector.load %arg3[%c0_12, %c0_13] : memref<8x32xf32, #tpu.memory_space<vmem>>, vector<8x32xf32>
    %30 = arith.mulf %28, %29 : vector<8x32xf32>
    %cst_14 = arith.constant dense<0.000000e+00> : vector<8xf32>
    %31 = vector.multi_reduction <add>, %30, %cst_14 [1] : vector<8x32xf32> to vector<8xf32>
    %32 = vector.shape_cast %31 : vector<8xf32> to vector<8x1xf32>
    %c0_15 = arith.constant 0 : index
    %c0_16 = arith.constant 0 : index
    %33 = vector.load %arg4[%c0_15, %c0_16] : memref<8x1xf32, #tpu.memory_space<vmem>>, vector<8x1xf32>
    %34 = arith.mulf %32, %33 : vector<8x1xf32>
    %35 = vector.shape_cast %34 : vector<8x1xf32> to vector<1x8x1xf32>
    %cst_17 = arith.constant dense<0.000000e+00> : vector<1xf32>
    %36 = vector.multi_reduction <add>, %35, %cst_17 [1, 2] : vector<1x8x1xf32> to vector<1xf32>
    %37 = vector.shape_cast %36 : vector<1xf32> to vector<1x1x1xf32>
    %38 = vector.extract %37[0, 0, 0] : f32 from vector<1x1x1xf32>
    %39 = vector.broadcast %38 : f32 to vector<8x128xf32>
    %c0_18 = arith.constant 0 : index
    %c0_19 = arith.constant 0 : index
    %40 = vector.load %arg5[%c0_18, %c0_19] : memref<8x128xf32, #tpu.memory_space<vmem>>, vector<8x128xf32>
    tpu.vector_store %arg5[%c0_18, %c0_19], %39 {strides = array<i32>} : memref<8x128xf32, #tpu.memory_space<vmem>>, vector<8x128xf32>,
    return
  }
  func.func @transform_0(%arg0: i32) -> (i32, i32) {
    %c0_i32 = arith.constant 0 : i32
    %c0_i32_0 = arith.constant 0 : i32
    return %arg0, %c0_i32 : i32, i32
  }
  func.func @transform_1(%arg0: i32) -> (i32, i32) {
    %c0_i32 = arith.constant 0 : i32
    %c0_i32_0 = arith.constant 0 : i32
    return %arg0, %c0_i32 : i32, i32
  }
  func.func @transform_2(%arg0: i32) -> (i32, i32) {
    %c0_i32 = arith.constant 0 : i32
    %c0_i32_0 = arith.constant 0 : i32
    return %arg0, %c0_i32 : i32, i32
  }
  func.func @transform_3(%arg0: i32) -> (i32, i32) {
    %c0_i32 = arith.constant 0 : i32
    %c0_i32_0 = arith.constant 0 : i32
    return %arg0, %c0_i32 : i32, i32
  }
  func.func @transform_4(%arg0: i32) -> (i32, i32) {
    %c0_i32 = arith.constant 0 : i32
    %c0_i32_0 = arith.constant 0 : i32
    return %arg0, %c0_i32 : i32, i32
  }
}

</mosaic_0001>

<llo_original>
// kernel: tpu_custom_call.1
$region0: #{tpu_custom_call.1}
  #allocation0 [shape = 'u32[]', space=smem, size = 0x4, offset = 0x4, fixed_abs, tag = 'smem constant byte address 0x4 - core index']
  #allocation1 [shape = 'u32[144,128]{1,0:T(1,128)}', space=vmem, size = 0x12000, scoped, tag = 'internal scratch']
  %s0 = inlined_call_operand.vmem [shape: f32[16,32], index: 0, kind: input, shape index: {}]
  %s1 = inlined_call_operand.hbm [shape: f32[16,32], index: 1, kind: input, shape index: {}]
  %s2 = inlined_call_operand.hbm [shape: f32[16,32], index: 2, kind: input, shape index: {}]
  %s3 = inlined_call_operand.vmem [shape: f32[16,1], index: 3, kind: input, shape index: {}]
  %s4 = inlined_call_operand.hbm [shape: f32[16,128], index: 4, kind: output, shape index: {}]
  %s5 = sld [smem:[#allocation0]]
  $region57: #{tpu_custom_call.1} parent=0
    _
  %s7 = ssub.s32 1, %s5
  %s8 = scalar_select 0, %s7, %s5
  $region1: #{tpu_custom_call.1} parent=0
    #allocation2 [shape = 'u8[8192]{0}', space=vmem, size = 0x2000, scoped, tag = 'input window, operand 1']
    #allocation3 [shape = 's32[2]{0}', space=sflag, size = 0x8, scoped, tag = 'scoped memory for tpu_custom_call.1']
    #allocation4 [shape = 's32[2]{0}', space=sflag, size = 0x8, scoped, tag = 'scoped memory for tpu_custom_call.1']
    #allocation5 [shape = 'u8[8192]{0}', space=vmem, size = 0x2000, scoped, tag = 'input window, operand 2']
    #allocation6 [shape = 's32[2]{0}', space=sflag, size = 0x8, scoped, tag = 'scoped memory for tpu_custom_call.1']
    #allocation7 [shape = 'u8[8192]{0}', space=vmem, size = 0x2000, scoped, tag = 'output window, operand 0']
    %9 = vsyncpa [#allocation3], 0
    %s10 = scalar_lea.sflag [#allocation3], 1
    %11 = vsyncpa %s10, 0
    %12 = vsyncpa [#allocation6], 0
    %s13 = scalar_lea.sflag [#allocation6], 1
    %14 = vsyncpa %s13, 0
    %15 = vsyncpa [#allocation4], 0
    %s16 = scalar_lea.sflag [#allocation4], 1
    %17 = vsyncpa %s16, 0
    loop: start=0, step=1, limit=4
    $region2: #{tpu_custom_call.1} parent=1 // loop_pre_header
      _
    $region3: #{tpu_custom_call.1} parent=1 // loop_header
      %s19 = sphi 0, %s23
      %p20 = scmp.ge.s32.totalorder %s19, 4
      %s29 = sphi 0, %s31
      %s32 = sphi 0, %s29
      %s33 = sphi 0, %s32
      %s49 = sphi 0, %s33
      %s55 = sphi 0, %s57
      %s58 = sphi 0, %s55
      %s59 = sphi 0, %s58
      %s75 = sphi 0, %s59
      %s81 = sphi 0, %s83
      %s84 = sphi 0, %s81
      %s85 = sphi 0, %s84
      %s101 = sphi 0, %s85
      %s107 = sphi 0, %s109
      %s110 = sphi 0, %s107
      %s111 = sphi 0, %s110
      %s127 = sphi 0, %s111
      %s133 = sphi 0, %s135
      %s136 = sphi 0, %s133
      %s137 = sphi 0, %s136
      %s153 = sphi 0, %s137
    $region4: #{tpu_custom_call.1} parent=1 // loop_header_branch
      %22 = sbr.rel (%p20) target = $region8
    $region5: #{tpu_custom_call.1} parent=1 // loop_body
      %s24 = ssub.s32 %s19, 1
      %s25 = ssub.s32 %s19, 2
      %s26 = sadd.s32 %s19, 1
      %s27 = ssub.s32 %s19, %s26
      %p28 = scmp.eq.s32.totalorder %s27, 0
      %s30 = sadd.s32 %s29, 1
      %s31 = scalar_select %p28, %s29, %s30
      %p34 = pneg %p28
      %p35 = scmp.eq.s32.totalorder %s19, 1
      %p36 = por %p34, %p35
      %p37 = scmp.ne.s32.totalorder %s29, %s32
      %p38 = scmp.eq.s32.totalorder %s19, 0
      %p39 = por %p37, %p38
      %p40 = scmp.ne.s32.totalorder %s29, %s32
      %p41 = scmp.eq.s32.totalorder %s24, 1
      %p42 = por %p40, %p41
      %p43 = scmp.ne.s32.totalorder %s32, %s33
      %p44 = scmp.eq.s32.totalorder %s24, 0
      %p45 = por %p43, %p44
      %p46 = scmp.ne.s32.totalorder %s32, %s33
      %p47 = scmp.eq.s32.totalorder %s25, 1
      %p48 = por %p46, %p47
      %p50 = scmp.ne.s32.totalorder %s33, %s49
      %p51 = scmp.eq.s32.totalorder %s25, 0
      %p52 = por %p50, %p51
      %s53 = ssub.s32 %s19, %s26
      %p54 = scmp.eq.s32.totalorder %s53, 0
      %s56 = sadd.s32 %s55, 1
      %s57 = scalar_select %p54, %s55, %s56
      %p60 = pneg %p54
      %p61 = scmp.eq.s32.totalorder %s19, 1
      %p62 = por %p60, %p61
      %p63 = scmp.ne.s32.totalorder %s55, %s58
      %p64 = scmp.eq.s32.totalorder %s19, 0
      %p65 = por %p63, %p64
      %p66 = scmp.ne.s32.totalorder %s55, %s58
      %p67 = scmp.eq.s32.totalorder %s24, 1
      %p68 = por %p66, %p67
      %p69 = scmp.ne.s32.totalorder %s58, %s59
      %p70 = scmp.eq.s32.totalorder %s24, 0
      %p71 = por %p69, %p70
      %p72 = scmp.ne.s32.totalorder %s58, %s59
      %p73 = scmp.eq.s32.totalorder %s25, 1
      %p74 = por %p72, %p73
      %p76 = scmp.ne.s32.totalorder %s59, %s75
      %p77 = scmp.eq.s32.totalorder %s25, 0
      %p78 = por %p76, %p77
      %s79 = ssub.s32 %s19, %s26
      %p80 = scmp.eq.s32.totalorder %s79, 0
      %s82 = sadd.s32 %s81, 1
      %s83 = scalar_select %p80, %s81, %s82
      %p86 = pneg %p80
      %p87 = scmp.eq.s32.totalorder %s19, 1
      %p88 = por %p86, %p87
      %p89 = scmp.ne.s32.totalorder %s81, %s84
      %p90 = scmp.eq.s32.totalorder %s19, 0
      %p91 = por %p89, %p90
      %p92 = scmp.ne.s32.totalorder %s81, %s84
      %p93 = scmp.eq.s32.totalorder %s24, 1
      %p94 = por %p92, %p93
      %p95 = scmp.ne.s32.totalorder %s84, %s85
      %p96 = scmp.eq.s32.totalorder %s24, 0
      %p97 = por %p95, %p96
      %p98 = scmp.ne.s32.totalorder %s84, %s85
      %p99 = scmp.eq.s32.totalorder %s25, 1
      %p100 = por %p98, %p99
      %p102 = scmp.ne.s32.totalorder %s85, %s101
      %p103 = scmp.eq.s32.totalorder %s25, 0
      %p104 = por %p102, %p103
      %s105 = ssub.s32 %s19, %s26
      %p106 = scmp.eq.s32.totalorder %s105, 0
      %s108 = sadd.s32 %s107, 1
      %s109 = scalar_select %p106, %s107, %s108
      %p112 = pneg %p106
      %p113 = scmp.eq.s32.totalorder %s19, 1
      %p114 = por %p112, %p113
      %p115 = scmp.ne.s32.totalorder %s107, %s110
      %p116 = scmp.eq.s32.totalorder %s19, 0
      %p117 = por %p115, %p116
      %p118 = scmp.ne.s32.totalorder %s107, %s110
      %p119 = scmp.eq.s32.totalorder %s24, 1
      %p120 = por %p118, %p119
      %p121 = scmp.ne.s32.totalorder %s110, %s111
      %p122 = scmp.eq.s32.totalorder %s24, 0
      %p123 = por %p121, %p122
      %p124 = scmp.ne.s32.totalorder %s110, %s111
      %p125 = scmp.eq.s32.totalorder %s25, 1
      %p126 = por %p124, %p125
      %p128 = scmp.ne.s32.totalorder %s111, %s127
      %p129 = scmp.eq.s32.totalorder %s25, 0
      %p130 = por %p128, %p129
      %s131 = ssub.s32 %s19, %s26
      %p132 = scmp.eq.s32.totalorder %s131, 0
      %s134 = sadd.s32 %s133, 1
      %s135 = scalar_select %p132, %s133, %s134
      %p138 = pneg %p132
      %p139 = scmp.eq.s32.totalorder %s19, 1
      %p140 = por %p138, %p139
      %p141 = scmp.ne.s32.totalorder %s133, %s136
      %p142 = scmp.eq.s32.totalorder %s19, 0
      %p143 = por %p141, %p142
      %p144 = scmp.ne.s32.totalorder %s133, %s136
      %p145 = scmp.eq.s32.totalorder %s24, 1
      %p146 = por %p144, %p145
      %p147 = scmp.ne.s32.totalorder %s136, %s137
      %p148 = scmp.eq.s32.totalorder %s24, 0
      %p149 = por %p147, %p148
      %p150 = scmp.ne.s32.totalorder %s136, %s137
      %p151 = scmp.eq.s32.totalorder %s25, 1
      %p152 = por %p150, %p151
      %p154 = scmp.ne.s32.totalorder %s137, %s153
      %p155 = scmp.eq.s32.totalorder %s25, 0
      %p156 = por %p154, %p155
      %p157 = scmp.le.s32.totalorder 1, %s19
      %p158 = scmp.lt.s32.totalorder %s19, 3
      %p159 = pnand %p157, %p158
      %p160 = pneg %p159
      // Predicated region
      $region9: #{tpu_custom_call.1} parent=5 // pred_check
        _
      $region10: #{tpu_custom_call.1} parent=5 // pred_check_branch
        %162 = sbr.rel (%p159) target = $region12
      $region11: #{tpu_custom_call.1} parent=5 // pred_region
        %s163 = ssub.s32 %s19, 1
      $region12: #{tpu_custom_call.1} parent=5 // pred_fallthru
        _
      %p164 = scmp.lt.s32.totalorder %s19, 2
      // Predicated region
      $region13: #{tpu_custom_call.1} parent=5 // pred_check
        %p165 = pneg %p164
      $region14: #{tpu_custom_call.1} parent=5 // pred_check_branch
        %167 = sbr.rel (%p165) target = $region16
      $region15: #{tpu_custom_call.1} parent=5 // pred_region
        // Predicated region
        $region17: #{tpu_custom_call.1} parent=15 // pred_check
          %p168 = pneg %p39
        $region18: #{tpu_custom_call.1} parent=15 // pred_check_branch
          %170 = sbr.rel (%p168) target = $region20
        $region19: #{tpu_custom_call.1} parent=15 // pred_region
          %p171 = scmp.lt.s32.totalorder %s19, 1
          %s172 = scalar_select %p171, %s19, 1
          %s173 = smul.addr %s172, 8
          %s174 = scalar_lea.vmem %s0, %s173
        $region20: #{tpu_custom_call.1} parent=15 // pred_fallthru
          _
        // Predicated region
        $region21: #{tpu_custom_call.1} parent=15 // pred_check
          %p175 = pneg %p65
        $region22: #{tpu_custom_call.1} parent=15 // pred_check_branch
          %177 = sbr.rel (%p175) target = $region24
        $region23: #{tpu_custom_call.1} parent=15 // pred_region
          %s178 = sand.u32 %s55, 1
          %s179 = scalar_lea.sflag [#allocation3], %s178
          %s180 = sand.u32 %s55, 1
          %s181 = smul.addr %s180, 8
          %s182 = scalar_lea.vmem [#allocation2], %s181
          %s184 = ssub.s32 128, 128
          %185 = vsyncadd %s179, %s184
          %s186 = smul.addr %s19, 128
          %s187 = scalar_lea.hbm %s1, %s186
          %s189 = sshll.u32 %s182, 4
          %s190 = int_to_ptr.vmem [resolvable:$true] %s189
          %192 = dma.hbm_to_vmem [thread:$0]  %s187, 128, %s190, %s179
        $region24: #{tpu_custom_call.1} parent=15 // pred_fallthru
          _
        // Predicated region
        $region25: #{tpu_custom_call.1} parent=15 // pred_check
          %p193 = pneg %p91
        $region26: #{tpu_custom_call.1} parent=15 // pred_check_branch
          %195 = sbr.rel (%p193) target = $region28
        $region27: #{tpu_custom_call.1} parent=15 // pred_region
          %s196 = sand.u32 %s81, 1
          %s197 = scalar_lea.sflag [#allocation6], %s196
          %s198 = sand.u32 %s81, 1
          %s199 = smul.addr %s198, 8
          %s200 = scalar_lea.vmem [#allocation5], %s199
          %s202 = ssub.s32 128, 128
          %203 = vsyncadd %s197, %s202
          %s204 = smul.addr %s19, 128
          %s205 = scalar_lea.hbm %s2, %s204
          %s207 = sshll.u32 %s200, 4
          %s208 = int_to_ptr.vmem [resolvable:$true] %s207
          %210 = dma.hbm_to_vmem [thread:$0]  %s205, 128, %s208, %s197
        $region28: #{tpu_custom_call.1} parent=15 // pred_fallthru
          _
        // Predicated region
        $region29: #{tpu_custom_call.1} parent=15 // pred_check
          %p211 = pneg %p117
        $region30: #{tpu_custom_call.1} parent=15 // pred_check_branch
          %213 = sbr.rel (%p211) target = $region32
        $region31: #{tpu_custom_call.1} parent=15 // pred_region
          %p214 = scmp.lt.s32.totalorder %s19, 1
          %s215 = scalar_select %p214, %s19, 1
          %s216 = smul.addr %s215, 8
          %s217 = scalar_lea.vmem %s3, %s216
        $region32: #{tpu_custom_call.1} parent=15 // pred_fallthru
          _
      $region16: #{tpu_custom_call.1} parent=5 // pred_fallthru
        _
      %p218 = scmp.le.s32.totalorder 1, %s19
      %p219 = scmp.lt.s32.totalorder %s19, 3
      %p220 = pnand %p218, %p219
      %p221 = pneg %p220
      // Predicated region
      $region33: #{tpu_custom_call.1} parent=5 // pred_check
        _
      $region34: #{tpu_custom_call.1} parent=5 // pred_check_branch
        %223 = sbr.rel (%p220) target = $region36
      $region35: #{tpu_custom_call.1} parent=5 // pred_region
        %s224 = ssub.s32 %s19, 1
        %s225 = sand.u32 %s58, 1
        %s226 = scalar_lea.sflag [#allocation3], %s225
        %s227 = sand.u32 %s58, 1
        %s228 = smul.addr %s227, 8
        %s229 = scalar_lea.vmem [#allocation2], %s228
        // Predicated region
        $region37: #{tpu_custom_call.1} parent=35 // pred_check
          %p230 = pneg %p71
        $region38: #{tpu_custom_call.1} parent=35 // pred_check_branch
          %232 = sbr.rel (%p230) target = $region40
        $region39: #{tpu_custom_call.1} parent=35 // pred_region
          %233 = dma.done %s226, 128
        $region40: #{tpu_custom_call.1} parent=35 // pred_fallthru
          _
        %s234 = sand.u32 %s84, 1
        %s235 = scalar_lea.sflag [#allocation6], %s234
        %s236 = sand.u32 %s84, 1
        %s237 = smul.addr %s236, 8
        %s238 = scalar_lea.vmem [#allocation5], %s237
        // Predicated region
        $region41: #{tpu_custom_call.1} parent=35 // pred_check
          %p239 = pneg %p97
        $region42: #{tpu_custom_call.1} parent=35 // pred_check_branch
          %241 = sbr.rel (%p239) target = $region44
        $region43: #{tpu_custom_call.1} parent=35 // pred_region
          %242 = dma.done %s235, 128
        $region44: #{tpu_custom_call.1} parent=35 // pred_fallthru
          _
        %p243 = scmp.lt.s32.totalorder %s24, 1
        %s244 = scalar_select %p243, %s24, 1
        %s245 = smul.addr %s244, 8
        %s246 = scalar_lea.vmem %s0, %s245
        %p247 = pneg %p45
        %p248 = pneg %p42
        %s249 = sand.u32 %s58, 1
        %s250 = scalar_lea.sflag [#allocation3], %s249
        %s251 = sand.u32 %s58, 1
        %s252 = smul.addr %s251, 8
        %s253 = scalar_lea.vmem [#allocation2], %s252
        %p254 = pneg %p71
        %p255 = pneg %p68
        %s256 = sand.u32 %s84, 1
        %s257 = scalar_lea.sflag [#allocation6], %s256
        %s258 = sand.u32 %s84, 1
        %s259 = smul.addr %s258, 8
        %s260 = scalar_lea.vmem [#allocation5], %s259
        %p261 = pneg %p97
        %p262 = pneg %p94
        %p263 = scmp.lt.s32.totalorder %s24, 1
        %s264 = scalar_select %p263, %s24, 1
        %s265 = smul.addr %s264, 8
        %s266 = scalar_lea.vmem %s3, %s265
        %p267 = pneg %p123
        %p268 = pneg %p120
        %p269 = pneg %p149
        %p270 = pneg %p146
        %s271 = sand.u32 %s136, 1
        %s272 = scalar_lea.sflag [#allocation4], %s271
        %s273 = sand.u32 %s136, 1
        %s274 = smul.addr %s273, 8
        %s275 = scalar_lea.vmem [#allocation7], %s274
        %p276 = scmp.lt.s32.totalorder %s24, 1
        %s277 = scalar_select %p276, %s24, 1
        %s278 = smul.addr %s277, 8
        %s279 = scalar_lea.vmem %s0, %s278
        %p280 = scmp.lt.s32.totalorder %s24, 1
        %s281 = scalar_select %p280, %s24, 1
        %s282 = smul.addr %s281, 8
        %s283 = scalar_lea.vmem %s3, %s282
        %v284 = vld [vmem:[%s279] sm:$0xff]
        %v285 = vld [vmem:[%s229] sm:$0xff]
        %vm286 = vcmp.gt.f32.partialorder %v285, 0.5
        %v287 = vsub.f32 0.0, %v284
        %v288 = vsel %vm286, %v284, %v287
        %v289 = vxor.u32 %v288, 2147483648
        %v290 = vmul.f32 %v289, 1.442695
        %v291 = vpow.pop %v290
        %v292 = vadd.f32 %v291, 1.0
        %v293 = vrcp.pop %v292
        %v294 = vmul.f32 1.0, %v293
        %v295 = vadd.f32 %v294, 0.05
        %v296 = vmin.f32 %v295, 1.0
        %v297 = vsel %vm286, %v294, %v296
        %v298 = vsel %vm286, -0.8, -0.2
        %v299 = vmax.f32 %v297, 1e-08
        %v300 = vlog2.pop %v299
        %v301 = vmul.f32 %v300, 0.6931472
        %v302 = vmul.f32 %v298, %v301
        %v303 = vsub.f32 1.0, %v294
        %v304 = vsel %vm286, 1.0, %v303
        %v305 = vmul.f32 %v302, %v304
        %v306 = vld [vmem:[%s238] sm:$0xff]
        %v307 = vmul.f32 %v305, %v306
        %vm308 = vcmask 261120
        %v309 = vsel %vm308, %v307, 0.0
        %310 = vadd.xlane.f32.xlu0 %v309
        %v311 = vpop.xlane.xlu0 %310
        %v312 = vld [vmem:[%s283] sm:$0xff]
        %v313 = vmul.f32 %v311, %v312
        %vm314 = vcmask 7168
        %v315 = vsel %vm314, %v313, 0.0
        %316 = vadd.xlane.f32.xlu0 %v315
        %v317 = vpop.xlane.xlu0 %316
        %v318 = vrot.slane %v317, 4
        %v319 = vadd.f32 %v317, %v318
        %v320 = vrot.slane %v319, 2
        %v321 = vadd.f32 %v319, %v320
        %v322 = vrot.slane %v321, 1
        %v323 = vadd.f32 %v321, %v322
        %s324 = vtos %v323
        %v325 = vstv %s324
        %326 = vst [vmem:[%s275] sm:$0xff] %v325
        %s327 = sand.u32 %s136, 1
        %s328 = scalar_lea.sflag [#allocation4], %s327
        %s329 = sand.u32 %s136, 1
        %s330 = smul.addr %s329, 8
        %s331 = scalar_lea.vmem [#allocation7], %s330
        // Predicated region
        $region45: #{tpu_custom_call.1} parent=35 // pred_check
          %p332 = pneg %p146
        $region46: #{tpu_custom_call.1} parent=35 // pred_check_branch
          %334 = sbr.rel (%p332) target = $region48
        $region47: #{tpu_custom_call.1} parent=35 // pred_region
          %s336 = ssub.s32 128, 128
          %337 = vsyncadd %s328, %s336
          %s338 = smul.addr %s24, 128
          %s339 = scalar_lea.hbm %s4, %s338
          %s341 = sshll.u32 %s331, 4
          %s342 = int_to_ptr.vmem [resolvable:$true] %s341
          %344 = dma.vmem_to_hbm [thread:$0]  %s342, 128, %s339, %s328
        $region48: #{tpu_custom_call.1} parent=35 // pred_fallthru
          _
      $region36: #{tpu_custom_call.1} parent=5 // pred_fallthru
        _
      %p345 = scmp.le.s32.totalorder 2, %s19
      // Predicated region
      $region49: #{tpu_custom_call.1} parent=5 // pred_check
        %p346 = pneg %p345
      $region50: #{tpu_custom_call.1} parent=5 // pred_check_branch
        %348 = sbr.rel (%p346) target = $region52
      $region51: #{tpu_custom_call.1} parent=5 // pred_region
        %s349 = ssub.s32 %s19, 2
        // Predicated region
        $region53: #{tpu_custom_call.1} parent=51 // pred_check
          %p350 = pneg %p152
        $region54: #{tpu_custom_call.1} parent=51 // pred_check_branch
          %352 = sbr.rel (%p350) target = $region56
        $region55: #{tpu_custom_call.1} parent=51 // pred_region
          %s353 = sand.u32 %s137, 1
          %s354 = scalar_lea.sflag [#allocation4], %s353
          %s355 = sand.u32 %s137, 1
          %s356 = smul.addr %s355, 8
          %s357 = scalar_lea.vmem [#allocation7], %s356
          %358 = dma.done %s354, 128
        $region56: #{tpu_custom_call.1} parent=51 // pred_fallthru
          _
      $region52: #{tpu_custom_call.1} parent=5 // pred_fallthru
        _
    $region6: #{tpu_custom_call.1} parent=1 // loop_footer
      %s23 = sadd.s32 1, %s19
    $region7: #{tpu_custom_call.1} parent=1 // loop_footer_branch
      %18 = sbr.rel target = $region3
    $region8: #{tpu_custom_call.1} parent=1 // loop_exit
      _
    %359 = vsyncpa [#allocation3], 1
    %s360 = scalar_lea.sflag [#allocation3], 1
    %361 = vsyncpa %s360, 1
    %362 = vsyncpa [#allocation6], 1
    %s363 = scalar_lea.sflag [#allocation6], 1
    %364 = vsyncpa %s363, 1
    %365 = vsyncpa [#allocation4], 1
    %s366 = scalar_lea.sflag [#allocation4], 1
    %367 = vsyncpa %s366, 1

</llo_original>
